<compile_context>
chip_gen: v5e
topology: v5e:2x2
jax: 0.10.0
libtpu: 0.0.40
codegen_flags: <defaults>
</compile_context>

<pallas_src>
import functools

import jax
import jax.numpy as jnp
from jax.experimental import pallas as pl
from jax.experimental.pallas import tpu as pltpu

EPS = 1e-5  # PyTorch nn.LayerNorm default eps


def prenorm_linear_kernel(x_ref, gamma_ref, beta_ref, w_ref, b_ref, o_ref,
                          y_ref, *, d_true):
    """One (tm, tn) output tile of fn(LayerNorm(x)) with fn = Linear.

    x_ref:     (tm, D_p)   row tile of the flattened (padded) input
    gamma_ref: (1, D_p)    LN weight (f32, zero in padded cols)
    beta_ref:  (1, D_p)    LN bias   (f32, zero in padded cols)
    w_ref:     (D_p, tn)   Linear weight tile (MXU dtype, zero-padded)
    b_ref:     (1, tn)     Linear bias tile (f32, zero-padded)
    o_ref:     (tm, tn)    output tile
    y_ref:     (tm, D_p)   MXU-dtype scratch caching the LayerNorm result for
                           this row tile; written once at j == 0 and reused
                           for every output-feature tile j > 0.
    """
    j = pl.program_id(1)

    @pl.when(j == 0)
    def _():
        x = x_ref[...].astype(jnp.float32)                    # (tm, D_p)
        inv_d = 1.0 / float(d_true)
        # One-pass statistics.  Padded feature columns are zero, so both sums
        # are already exact for the true feature width d_true (no mask needed).
        mean = jnp.sum(x, axis=-1, keepdims=True) * inv_d
        ex2 = jnp.sum(x * x, axis=-1, keepdims=True) * inv_d
        var = jnp.maximum(ex2 - mean * mean, 0.0)             # clamp rounding
        inv = jax.lax.rsqrt(var + EPS)
        # gamma/beta are zero in padded columns -> y is zero there, so padded
        # rows of W contribute nothing to the matmul below.
        y = (x - mean) * inv * gamma_ref[...] + beta_ref[...]
        y_ref[...] = y.astype(y_ref.dtype)                    # stored in MXU dtype

    # Fused fn = Linear: MXU matmul in the scratch dtype, f32 accumulation.
    out = jnp.dot(y_ref[...], w_ref[...], preferred_element_type=jnp.float32)
    o_ref[...] = (out + b_ref[...]).astype(o_ref.dtype)


def _round_up(a, m):
    return (a + m - 1) // m * m


def _pad_cast_2d(a, rows, cols, dtype):
    """Zero-pad / cast to (rows, cols, dtype); no copy if already conforming."""
    r, c = a.shape
    dtype = jnp.dtype(dtype)
    if (r, c) == (rows, cols):
        return a if a.dtype == dtype else a.astype(dtype)
    return jnp.zeros((rows, cols), dtype).at[:r, :c].set(a.astype(dtype))


def _vmem_capacity_bytes():
    try:
        cap = getattr(pltpu.get_tpu_info(), "vmem_capacity_bytes", None)
        if cap:
            return int(cap)
    except Exception:
        pass
    return 64 << 20  # conservative default = v7x per-TensorCore VMEM


def prenorm_linear(x, gamma, beta, w, b, *, tm=512, tn=256, mxu_dtype=None):
    """PreNorm(dim, Linear(dim, d_out)) forward: fn(LayerNorm(x)).

    x: (B, N, D); gamma/beta: (D,); w: (D, D_out); b: (D_out,).
    """
    out_dtype = x.dtype
    B, N, D = x.shape
    D_out = w.shape[1]
    M = B * N

    # MXU operand dtype: bf16 by default (native on v5e/v6e/v7x) even for f32
    # inputs; LN statistics + matmul accumulation stay f32.  Pass
    # mxu_dtype=jnp.float32 if bit-heavier operands are required.
    if mxu_dtype is None:
        mxu_dt = (jnp.dtype(jnp.bfloat16) if jnp.dtype(x.dtype) == jnp.float32
                  else jnp.dtype(x.dtype))
    else:
        mxu_dt = jnp.dtype(mxu_dtype)

    x_item = jnp.dtype(x.dtype).itemsize
    w_item = mxu_dt.itemsize
    o_item = jnp.dtype(out_dtype).itemsize

    # Sublane granularity: 8 for pure-f32 tiles, 16 once any bf16 tile exists.
    sub = 8 if (x_item == 4 and w_item == 4 and o_item == 4) else 16

    # --- tiling ---------------------------------------------------------------
    tm = _round_up(max(sub, min(int(tm), _round_up(M, sub))), sub)
    if M > sub:
        # Keep >= 2 row tiles so the "parallel" i axis splits across both
        # TensorCores on v7x (no-op for large M).
        tm = min(tm, _round_up(pl.cdiv(M, 2), sub))

    D_p = _round_up(D, 128)      # lane-dense feature dim
    N_p = _round_up(D_out, 128)  # lane-dense output dim

    def _vmem_est(tm_, tn_):
        return (2 * tm_ * D_p * x_item        # x row tile (double-buffered)
                + 2 * D_p * tn_ * w_item      # W tile (double-buffered)
                + 2 * tm_ * tn_ * o_item      # out tile (double-buffered)
                + tm_ * D_p * w_item          # y scratch (MXU dtype)
                + 4 * D_p * 4 + 4 * tn_ * 4)  # gamma / beta / bias

    vmem_cap = _vmem_capacity_bytes()
    # ~96 MiB working set on 128-MiB chips (v5e/v6e), ~40 MiB on 64-MiB v7x.
    VMEM_BUDGET = max(min(vmem_cap * 3 // 4, vmem_cap - (24 << 20)), 24 << 20)

    # Prefer the whole (padded) weight resident in VMEM: its block index is
    # then constant across the grid and Pallas DMAs it from HBM exactly once.
    tm_res = tm
    while _vmem_est(tm_res, N_p) > VMEM_BUDGET and tm_res > max(sub, 256):
        tm_res = max(sub, _round_up(tm_res // 2, sub))
    if _vmem_est(tm_res, N_p) <= VMEM_BUDGET:
        tm, tn = tm_res, N_p
    else:
        # Stream W in tn-wide tiles; prefer multiples of 256 (full v6e/v7x MXU
        # width), fall back to 128 (native on v5e).
        tn = min(int(tn), N_p)
        if N_p % tn != 0:
            tn = 256 if N_p % 256 == 0 else 128
        while _vmem_est(tm, tn) > VMEM_BUDGET and tm > sub:
            tm = max(sub, _round_up(tm // 2, sub))
        while _vmem_est(tm, tn) > VMEM_BUDGET and tn > 128:
            tn = max(128, tn // 2)

    M_p = _round_up(M, tm)
    vmem_limit = int(min(max(_vmem_est(tm, tn) + (8 << 20), 32 << 20),
                         vmem_cap - (8 << 20)))

    # --- operands (pad only when needed; LN stays exact either way) ------------
    x2 = _pad_cast_2d(x.reshape(M, D), M_p, D_p, x.dtype)
    g2 = _pad_cast_2d(gamma.reshape(1, D), 1, D_p, jnp.float32)
    be2 = _pad_cast_2d(beta.reshape(1, D), 1, D_p, jnp.float32)
    w2 = _pad_cast_2d(w, D_p, N_p, mxu_dt)
    bias2 = _pad_cast_2d(b.reshape(1, D_out), 1, N_p, jnp.float32)

    grid = (M_p // tm, N_p // tn)   # j (output-feature tiles) is the inner axis
    n_w_passes = 1 if tn == N_p else grid[0]
    cost = pl.CostEstimate(
        flops=2 * M_p * D_p * N_p,
        transcendentals=M_p,
        bytes_accessed=(M_p * D_p * x_item + D_p * N_p * w_item * n_w_passes
                        + M_p * N_p * o_item + (2 * D_p + N_p) * 4),
    )

    kernel = functools.partial(prenorm_linear_kernel, d_true=D)

    out = pl.pallas_call(
        kernel,
        out_shape=jax.ShapeDtypeStruct((M_p, N_p), out_dtype),
        grid_spec=pltpu.PrefetchScalarGridSpec(
            num_scalar_prefetch=0,
            grid=grid,
            in_specs=[
                pl.BlockSpec((tm, D_p), lambda i, j: (i, 0)),   # x row tile
                pl.BlockSpec((1, D_p), lambda i, j: (0, 0)),    # gamma
                pl.BlockSpec((1, D_p), lambda i, j: (0, 0)),    # beta
                pl.BlockSpec((D_p, tn), lambda i, j: (0, j)),   # W tile
                pl.BlockSpec((1, tn), lambda i, j: (0, j)),     # bias tile
            ],
            out_specs=pl.BlockSpec((tm, tn), lambda i, j: (i, j)),
            scratch_shapes=[pltpu.VMEM((tm, D_p), mxu_dt)],     # cached LN result
        ),
        compiler_params=pltpu.CompilerParams(
            # row tiles are independent -> "parallel" (megacore split on v7x);
            # j must stay "arbitrary" because the y scratch is reused across j.
            dimension_semantics=("parallel", "arbitrary"),
            vmem_limit_bytes=vmem_limit,
        ),
        cost_estimate=cost,
    )(x2, g2, be2, w2, bias2)

    return out[:M, :D_out].reshape(B, N, D_out)


def prenorm_linear_ref(x, gamma, beta, w, b):
    xf = x.astype(jnp.float32)
    mean = jnp.mean(xf, axis=-1, keepdims=True)
    var = jnp.mean((xf - mean) ** 2, axis=-1, keepdims=True)
    y = (xf - mean) * jax.lax.rsqrt(var + EPS) * gamma + beta
    return (y @ w.astype(jnp.float32) + b).astype(x.dtype)


if __name__ == "__main__":
    key = jax.random.PRNGKey(0)
    kx, kg, kb, kw, kbias = jax.random.split(key, 5)

    B, N, D, D_OUT = 2, 8, 32, 32
    x = jax.random.normal(kx, (B, N, D), dtype=jnp.float32)
    # LayerNorm params (PyTorch default init is ones/zeros; perturb so the
    # affine path is actually exercised).
    gamma = 1.0 + 0.1 * jax.random.normal(kg, (D,), dtype=jnp.float32)
    beta = 0.1 * jax.random.normal(kb, (D,), dtype=jnp.float32)
    # fn = Linear(D, D_OUT)
    w = jax.random.normal(kw, (D, D_OUT), dtype=jnp.float32) / jnp.sqrt(D)
    b = 0.1 * jax.random.normal(kbias, (D_OUT,), dtype=jnp.float32)

    ref = prenorm_linear_ref(x, gamma, beta, w, b)

    # f32 MXU-operand path (exactness / plumbing check).
    out_f32 = jax.block_until_ready(
        prenorm_linear(x, gamma, beta, w, b, mxu_dtype=jnp.float32))
    assert out_f32.shape == (B, N, D_OUT)
    assert jnp.allclose(out_f32, ref, atol=2e-2, rtol=2e-2), "f32-path mismatch"

    # Default fast path: bf16 MXU operands, f32 LN stats + accumulation.
    out = jax.block_until_ready(prenorm_linear(x, gamma, beta, w, b))
    assert out.shape == (B, N, D_OUT)
    assert jnp.allclose(out, ref, atol=3e-2, rtol=3e-2), "mismatch vs reference"

    print("KERNEL_OK")
</pallas_src>

<mosaic_0001>
module attributes {stable_mosaic.version = 11 : i64} {
  func.func @prenorm_linear_kernel(%arg0: i32, %arg1: i32, %arg2: memref<8x128xf32, #tpu.memory_space<vmem>>, %arg3: memref<1x128xf32, #tpu.memory_space<vmem>>, %arg4: memref<1x128xf32, #tpu.memory_space<vmem>>, %arg5: memref<128x128xf32, #tpu.memory_space<vmem>>, %arg6: memref<1x128xf32, #tpu.memory_space<vmem>>, %arg7: memref<8x128xf32, #tpu.memory_space<vmem>>, %arg8: memref<8x128xf32, #tpu.memory_space<vmem>>) attributes {dimension_semantics = [#tpu.dimension_semantics<parallel>, #tpu.dimension_semantics<arbitrary>], iteration_bounds = array<i64: 2, 1>, scalar_prefetch = 0 : i64, scratch_operands = 1 : i64, tpu.core_type = #tpu.core_type<tc>, window_params = [{transform_indices = @transform_0, window_bounds = array<i64: 8, 128>}, {pipeline_mode = #tpu.pipeline_mode<synchronous>, transform_indices = @transform_1, window_bounds = array<i64: 1, 128>}, {pipeline_mode = #tpu.pipeline_mode<synchronous>, transform_indices = @transform_2, window_bounds = array<i64: 1, 128>}, {transform_indices = @transform_3, window_bounds = array<i64: 128, 128>}, {transform_indices = @transform_4, window_bounds = array<i64: 1, 128>}, {transform_indices = @transform_5, window_bounds = array<i64: 8, 128>}]} {
    %c0_i32 = arith.constant 0 : i32
    %0 = arith.cmpi eq, %arg1, %c0_i32 : i32
    %1 = arith.extui %0 : i1 to i32
    %c0_i32_0 = arith.constant 0 : i32
    %2 = arith.cmpi ne, %1, %c0_i32_0 : i32
    scf.if %2 {
      %c0_8 = arith.constant 0 : index
      %c0_9 = arith.constant 0 : index
      %10 = vector.load %arg2[%c0_8, %c0_9] : memref<8x128xf32, #tpu.memory_space<vmem>>, vector<8x128xf32>
      %cst_10 = arith.constant dense<0.000000e+00> : vector<8xf32>
      %11 = vector.multi_reduction <add>, %10, %cst_10 [1] : vector<8x128xf32> to vector<8xf32>
      %12 = vector.shape_cast %11 : vector<8xf32> to vector<8x1xf32>
      %cst_11 = arith.constant 3.125000e-02 : f32
      %13 = vector.broadcast %cst_11 : f32 to vector<8x1xf32>
      %14 = arith.mulf %12, %13 : vector<8x1xf32>
      %15 = arith.mulf %10, %10 : vector<8x128xf32>
      %cst_12 = arith.constant dense<0.000000e+00> : vector<8xf32>
      %16 = vector.multi_reduction <add>, %15, %cst_12 [1] : vector<8x128xf32> to vector<8xf32>
      %17 = vector.shape_cast %16 : vector<8xf32> to vector<8x1xf32>
      %cst_13 = arith.constant 3.125000e-02 : f32
      %18 = vector.broadcast %cst_13 : f32 to vector<8x1xf32>
      %19 = arith.mulf %17, %18 : vector<8x1xf32>
      %20 = arith.mulf %14, %14 : vector<8x1xf32>
      %21 = arith.subf %19, %20 : vector<8x1xf32>
      %cst_14 = arith.constant 0.000000e+00 : f32
      %22 = vector.broadcast %cst_14 : f32 to vector<8x1xf32>
      %23 = arith.maximumf %21, %22 : vector<8x1xf32>
      %cst_15 = arith.constant 9.99999974E-6 : f32
      %24 = vector.broadcast %cst_15 : f32 to vector<8x1xf32>
      %25 = arith.addf %23, %24 : vector<8x1xf32>
      %26 = math.rsqrt %25 : vector<8x1xf32>
      %27 = vector.broadcast %14 : vector<8x1xf32> to vector<8x128xf32>
      %28 = arith.subf %10, %27 : vector<8x128xf32>
      %29 = vector.broadcast %26 : vector<8x1xf32> to vector<8x128xf32>
      %30 = arith.mulf %28, %29 : vector<8x128xf32>
      %c0_16 = arith.constant 0 : index
      %c0_17 = arith.constant 0 : index
      %31 = vector.load %arg3[%c0_16, %c0_17] : memref<1x128xf32, #tpu.memory_space<vmem>>, vector<1x128xf32>
      %32 = vector.broadcast %31 : vector<1x128xf32> to vector<8x128xf32>
      %33 = arith.mulf %30, %32 : vector<8x128xf32>
      %c0_18 = arith.constant 0 : index
      %c0_19 = arith.constant 0 : index
      %34 = vector.load %arg4[%c0_18, %c0_19] : memref<1x128xf32, #tpu.memory_space<vmem>>, vector<1x128xf32>
      %35 = vector.broadcast %34 : vector<1x128xf32> to vector<8x128xf32>
      %36 = arith.addf %33, %35 : vector<8x128xf32>
      %c0_20 = arith.constant 0 : index
      %c0_21 = arith.constant 0 : index
      %37 = vector.load %arg8[%c0_20, %c0_21] : memref<8x128xf32, #tpu.memory_space<vmem>>, vector<8x128xf32>
      tpu.vector_store %arg8[%c0_20, %c0_21], %36 {strides = array<i32>} : memref<8x128xf32, #tpu.memory_space<vmem>>, vector<8x128xf32>,
    } else {
    }
    %c0 = arith.constant 0 : index
    %c0_1 = arith.constant 0 : index
    %3 = vector.load %arg8[%c0, %c0_1] : memref<8x128xf32, #tpu.memory_space<vmem>>, vector<8x128xf32>
    %c0_2 = arith.constant 0 : index
    %c0_3 = arith.constant 0 : index
    %4 = vector.load %arg5[%c0_2, %c0_3] : memref<128x128xf32, #tpu.memory_space<vmem>>, vector<128x128xf32>
    %cst = arith.constant dense<0.000000e+00> : vector<8x128xf32>
    %5 = tpu.matmul %3, %4, %cst {dimension_numbers = #tpu.dot_dimension_numbers<[1], [0], [0], [1], [0, 0, 1, 1], [], []>} : vector<8x128xf32>, vector<128x128xf32>, vector<8x128xf32> -> vector<8x128xf32>
    %c0_4 = arith.constant 0 : index
    %c0_5 = arith.constant 0 : index
    %6 = vector.load %arg6[%c0_4, %c0_5] : memref<1x128xf32, #tpu.memory_space<vmem>>, vector<1x128xf32>
    %7 = vector.broadcast %6 : vector<1x128xf32> to vector<8x128xf32>
    %8 = arith.addf %5, %7 : vector<8x128xf32>
    %c0_6 = arith.constant 0 : index
    %c0_7 = arith.constant 0 : index
    %9 = vector.load %arg7[%c0_6, %c0_7] : memref<8x128xf32, #tpu.memory_space<vmem>>, vector<8x128xf32>
    tpu.vector_store %arg7[%c0_6, %c0_7], %8 {strides = array<i32>} : memref<8x128xf32, #tpu.memory_space<vmem>>, vector<8x128xf32>,
    return
  }
  func.func @transform_0(%arg0: i32, %arg1: i32) -> (i32, i32) {
    %c0_i32 = arith.constant 0 : i32
    %c0_i32_0 = arith.constant 0 : i32
    return %arg0, %c0_i32 : i32, i32
  }
  func.func @transform_1(%arg0: i32, %arg1: i32) -> (i32, i32) {
    %c0_i32 = arith.constant 0 : i32
    %c0_i32_0 = arith.constant 0 : i32
    %c0_i32_1 = arith.constant 0 : i32
    return %c0_i32, %c0_i32_0 : i32, i32
  }
  func.func @transform_2(%arg0: i32, %arg1: i32) -> (i32, i32) {
    %c0_i32 = arith.constant 0 : i32
    %c0_i32_0 = arith.constant 0 : i32
    %c0_i32_1 = arith.constant 0 : i32
    return %c0_i32, %c0_i32_0 : i32, i32
  }
  func.func @transform_3(%arg0: i32, %arg1: i32) -> (i32, i32) {
    %c0_i32 = arith.constant 0 : i32
    %c0_i32_0 = arith.constant 0 : i32
    return %c0_i32, %arg1 : i32, i32
  }
  func.func @transform_4(%arg0: i32, %arg1: i32) -> (i32, i32) {
    %c0_i32 = arith.constant 0 : i32
    %c0_i32_0 = arith.constant 0 : i32
    return %c0_i32, %arg1 : i32, i32
  }
  func.func @transform_5(%arg0: i32, %arg1: i32) -> (i32, i32) {
    %c0_i32 = arith.constant 0 : i32
    return %arg0, %arg1 : i32, i32
  }
}

</mosaic_0001>

<llo_original>
// kernel: tpu_custom_call.1
$region0: #{tpu_custom_call.1}
  #allocation0 [shape = 'u32[]', space=smem, size = 0x4, offset = 0x4, fixed_abs, tag = 'smem constant byte address 0x4 - core index']
  #allocation1 [shape = 'u32[72,128]{1,0:T(1,128)}', space=vmem, size = 0x9000, scoped, tag = 'internal scratch']
  #allocation2 [shape = 'f32[8,128]{1,0:T(8,128)}', space=vmem, size = 0x1000, scoped, tag = 'scratch operand']
  %s0 = inlined_call_operand.hbm [shape: f32[16,128], index: 0, kind: input, shape index: {}]
  %s1 = inlined_call_operand.hbm [shape: f32[1,128], index: 1, kind: input, shape index: {}]
  %s2 = inlined_call_operand.vmem [shape: f32[1,128], index: 2, kind: input, shape index: {}]
  %s3 = inlined_call_operand.hbm [shape: f32[128,128], index: 3, kind: input, shape index: {}]
  %s4 = inlined_call_operand.vmem [shape: f32[1,128], index: 4, kind: input, shape index: {}]
  %s5 = inlined_call_operand.hbm [shape: f32[16,128], index: 5, kind: output, shape index: {}]
  %s6 = sld [smem:[#allocation0]]
  $region69: #{tpu_custom_call.1} parent=0
    _
  %s8 = ssub.s32 1, %s6
  %s9 = scalar_select 0, %s8, %s6
  $region1: #{tpu_custom_call.1} parent=0
    #allocation3 [shape = 'u8[8192]{0}', space=vmem, size = 0x2000, scoped, tag = 'input window, operand 0']
    #allocation4 [shape = 's32[2]{0}', space=sflag, size = 0x8, scoped, tag = 'scoped memory for tpu_custom_call.1']
    #allocation5 [shape = 's32[2]{0}', space=sflag, size = 0x8, scoped, tag = 'scoped memory for tpu_custom_call.1']
    #allocation6 [shape = 'u8[512]{0}', space=vmem, size = 0x400, scoped, tag = 'input window, operand 1, single buffered']
    #allocation7 [shape = 's32[1]{0}', space=sflag, size = 0x4, scoped, tag = 'scoped memory for tpu_custom_call.1']
    #allocation8 [shape = 'u8[65536]{0}', space=vmem, size = 0x10000, scoped, tag = 'input window, operand 3, single buffered']
    #allocation9 [shape = 'u8[8192]{0}', space=vmem, size = 0x2000, scoped, tag = 'output window, operand 0']
    %10 = vsyncpa [#allocation4], 0
    %s11 = scalar_lea.sflag [#allocation4], 1
    %12 = vsyncpa %s11, 0
    %13 = vsyncpa [#allocation7], 0
    %14 = vsyncpa [#allocation5], 0
    %s15 = scalar_lea.sflag [#allocation5], 1
    %16 = vsyncpa %s15, 0
    loop: start=0, step=1, limit=4
    $region2: #{tpu_custom_call.1} parent=1 // loop_pre_header
      _
    $region3: #{tpu_custom_call.1} parent=1 // loop_header
      %s18 = sphi 0, %s22
      %p19 = scmp.ge.s32.totalorder %s18, 4
      %s25 = sphi 0, %s37
      %s26 = sphi 0, %s33
      %s27 = sphi 0, %s25
      %s28 = sphi 0, %s26
      %s29 = sphi 0, %s27
      %s30 = sphi 0, %s28
      %s40 = sphi 0, %s42
      %s43 = sphi 0, %s40
      %s44 = sphi 0, %s43
      %s60 = sphi 0, %s44
      %s64 = sphi 0, %s64
      %s66 = sphi 0, %s64
      %s67 = sphi 0, %s66
      %s81 = sphi 0, %s67
      %s85 = sphi 0, %s85
      %s87 = sphi 0, %s85
      %s88 = sphi 0, %s87
      %s102 = sphi 0, %s88
      %s108 = sphi 0, %s110
      %s111 = sphi 0, %s108
      %s112 = sphi 0, %s111
      %s128 = sphi 0, %s112
      %s134 = sphi 0, %s136
      %s137 = sphi 0, %s134
      %s138 = sphi 0, %s137
      %s154 = sphi 0, %s138
      %s162 = sphi 0, %s164
      %s165 = sphi 0, %s162
      %s166 = sphi 0, %s165
      %s182 = sphi 0, %s166
    $region4: #{tpu_custom_call.1} parent=1 // loop_header_branch
      %21 = sbr.rel (%p19) target = $region8
    $region5: #{tpu_custom_call.1} parent=1 // loop_body
      %s23 = ssub.s32 %s18, 1
      %s24 = ssub.s32 %s18, 2
      %s31 = sadd.s32 1, %s26
      %p32 = scmp.ge.s32.totalorder %s31, 1
      %s33 = scalar_select %p32, 0, %s31
      %s34 = sadd.s32 1, %s25
      %s35 = scalar_select %p32, %s34, %s25
      %p36 = scmp.ge.s32.totalorder %s35, 2
      %s37 = scalar_select %p36, 0, %s35
      %s38 = ssub.s32 %s25, %s37
      %p39 = scmp.eq.s32.totalorder %s38, 0
      %s41 = sadd.s32 %s40, 1
      %s42 = scalar_select %p39, %s40, %s41
      %p45 = pneg %p39
      %p46 = scmp.eq.s32.totalorder %s18, 1
      %p47 = por %p45, %p46
      %p48 = scmp.ne.s32.totalorder %s40, %s43
      %p49 = scmp.eq.s32.totalorder %s18, 0
      %p50 = por %p48, %p49
      %p51 = scmp.ne.s32.totalorder %s40, %s43
      %p52 = scmp.eq.s32.totalorder %s23, 1
      %p53 = por %p51, %p52
      %p54 = scmp.ne.s32.totalorder %s43, %s44
      %p55 = scmp.eq.s32.totalorder %s23, 0
      %p56 = por %p54, %p55
      %p57 = scmp.ne.s32.totalorder %s43, %s44
      %p58 = scmp.eq.s32.totalorder %s24, 1
      %p59 = por %p57, %p58
      %p61 = scmp.ne.s32.totalorder %s44, %s60
      %p62 = scmp.eq.s32.totalorder %s24, 0
      %p63 = por %p61, %p62
      %s65 = sadd.s32 %s64, 1
      %p68 = scmp.eq.s32.totalorder %s18, 1
      %p69 = scmp.ne.s32.totalorder %s64, %s66
      %p70 = scmp.eq.s32.totalorder %s18, 0
      %p71 = por %p69, %p70
      %p72 = scmp.ne.s32.totalorder %s64, %s66
      %p73 = scmp.eq.s32.totalorder %s23, 1
      %p74 = por %p72, %p73
      %p75 = scmp.ne.s32.totalorder %s66, %s67
      %p76 = scmp.eq.s32.totalorder %s23, 0
      %p77 = por %p75, %p76
      %p78 = scmp.ne.s32.totalorder %s66, %s67
      %p79 = scmp.eq.s32.totalorder %s24, 1
      %p80 = por %p78, %p79
      %p82 = scmp.ne.s32.totalorder %s67, %s81
      %p83 = scmp.eq.s32.totalorder %s24, 0
      %p84 = por %p82, %p83
      %s86 = sadd.s32 %s85, 1
      %p89 = scmp.eq.s32.totalorder %s18, 1
      %p90 = scmp.ne.s32.totalorder %s85, %s87
      %p91 = scmp.eq.s32.totalorder %s18, 0
      %p92 = por %p90, %p91
      %p93 = scmp.ne.s32.totalorder %s85, %s87
      %p94 = scmp.eq.s32.totalorder %s23, 1
      %p95 = por %p93, %p94
      %p96 = scmp.ne.s32.totalorder %s87, %s88
      %p97 = scmp.eq.s32.totalorder %s23, 0
      %p98 = por %p96, %p97
      %p99 = scmp.ne.s32.totalorder %s87, %s88
      %p100 = scmp.eq.s32.totalorder %s24, 1
      %p101 = por %p99, %p100
      %p103 = scmp.ne.s32.totalorder %s88, %s102
      %p104 = scmp.eq.s32.totalorder %s24, 0
      %p105 = por %p103, %p104
      %s106 = ssub.s32 %s26, %s33
      %p107 = scmp.eq.s32.totalorder %s106, 0
      %s109 = sadd.s32 %s108, 1
      %s110 = scalar_select %p107, %s108, %s109
      %p113 = pneg %p107
      %p114 = scmp.eq.s32.totalorder %s18, 1
      %p115 = por %p113, %p114
      %p116 = scmp.ne.s32.totalorder %s108, %s111
      %p117 = scmp.eq.s32.totalorder %s18, 0
      %p118 = por %p116, %p117
      %p119 = scmp.ne.s32.totalorder %s108, %s111
      %p120 = scmp.eq.s32.totalorder %s23, 1
      %p121 = por %p119, %p120
      %p122 = scmp.ne.s32.totalorder %s111, %s112
      %p123 = scmp.eq.s32.totalorder %s23, 0
      %p124 = por %p122, %p123
      %p125 = scmp.ne.s32.totalorder %s111, %s112
      %p126 = scmp.eq.s32.totalorder %s24, 1
      %p127 = por %p125, %p126
      %p129 = scmp.ne.s32.totalorder %s112, %s128
      %p130 = scmp.eq.s32.totalorder %s24, 0
      %p131 = por %p129, %p130
      %s132 = ssub.s32 %s26, %s33
      %p133 = scmp.eq.s32.totalorder %s132, 0
      %s135 = sadd.s32 %s134, 1
      %s136 = scalar_select %p133, %s134, %s135
      %p139 = pneg %p133
      %p140 = scmp.eq.s32.totalorder %s18, 1
      %p141 = por %p139, %p140
      %p142 = scmp.ne.s32.totalorder %s134, %s137
      %p143 = scmp.eq.s32.totalorder %s18, 0
      %p144 = por %p142, %p143
      %p145 = scmp.ne.s32.totalorder %s134, %s137
      %p146 = scmp.eq.s32.totalorder %s23, 1
      %p147 = por %p145, %p146
      %p148 = scmp.ne.s32.totalorder %s137, %s138
      %p149 = scmp.eq.s32.totalorder %s23, 0
      %p150 = por %p148, %p149
      %p151 = scmp.ne.s32.totalorder %s137, %s138
      %p152 = scmp.eq.s32.totalorder %s24, 1
      %p153 = por %p151, %p152
      %p155 = scmp.ne.s32.totalorder %s138, %s154
      %p156 = scmp.eq.s32.totalorder %s24, 0
      %p157 = por %p155, %p156
      %s158 = ssub.s32 %s25, %s37
      %s159 = ssub.s32 %s26, %s33
      %s160 = sor.u32 %s158, %s159
      %p161 = scmp.eq.s32.totalorder %s160, 0
      %s163 = sadd.s32 %s162, 1
      %s164 = scalar_select %p161, %s162, %s163
      %p167 = pneg %p161
      %p168 = scmp.eq.s32.totalorder %s18, 1
      %p169 = por %p167, %p168
      %p170 = scmp.ne.s32.totalorder %s162, %s165
      %p171 = scmp.eq.s32.totalorder %s18, 0
      %p172 = por %p170, %p171
      %p173 = scmp.ne.s32.totalorder %s162, %s165
      %p174 = scmp.eq.s32.totalorder %s23, 1
      %p175 = por %p173, %p174
      %p176 = scmp.ne.s32.totalorder %s165, %s166
      %p177 = scmp.eq.s32.totalorder %s23, 0
      %p178 = por %p176, %p177
      %p179 = scmp.ne.s32.totalorder %s165, %s166
      %p180 = scmp.eq.s32.totalorder %s24, 1
      %p181 = por %p179, %p180
      %p183 = scmp.ne.s32.totalorder %s166, %s182
      %p184 = scmp.eq.s32.totalorder %s24, 0
      %p185 = por %p183, %p184
      %p186 = scmp.le.s32.totalorder 1, %s18
      %p187 = scmp.lt.s32.totalorder %s18, 3
      %p188 = pnand %p186, %p187
      %p189 = pneg %p188
      // Predicated region
      $region9: #{tpu_custom_call.1} parent=5 // pred_check
        _
      $region10: #{tpu_custom_call.1} parent=5 // pred_check_branch
        %191 = sbr.rel (%p188) target = $region12
      $region11: #{tpu_custom_call.1} parent=5 // pred_region
        %s192 = ssub.s32 %s18, 1
        // Predicated region
        $region13: #{tpu_custom_call.1} parent=11 // pred_check
          %p193 = pneg %p77
        $region14: #{tpu_custom_call.1} parent=11 // pred_check_branch
          %195 = sbr.rel (%p193) target = $region16
        $region15: #{tpu_custom_call.1} parent=11 // pred_region
          %197 = vsyncadd [#allocation7], 0
          %s199 = sshll.u32 %s1, 4
          %s200 = int_to_ptr.hbm [resolvable:$true] %s199
          %s201 = sshll.u32 [#allocation6], 4
          %s202 = int_to_ptr.vmem [resolvable:$true] %s201
          %204 = dma.hbm_to_vmem [thread:$0]  %s200, 16, %s202, [#allocation7]
        $region16: #{tpu_custom_call.1} parent=11 // pred_fallthru
          _
        // Predicated region
        $region17: #{tpu_custom_call.1} parent=11 // pred_check
          %p205 = pneg %p98
        $region18: #{tpu_custom_call.1} parent=11 // pred_check_branch
          %207 = sbr.rel (%p205) target = $region20
        $region19: #{tpu_custom_call.1} parent=11 // pred_region
          _
        $region20: #{tpu_custom_call.1} parent=11 // pred_fallthru
          _
        // Predicated region
        $region21: #{tpu_custom_call.1} parent=11 // pred_check
          %p208 = pneg %p124
        $region22: #{tpu_custom_call.1} parent=11 // pred_check_branch
          %210 = sbr.rel (%p208) target = $region24
        $region23: #{tpu_custom_call.1} parent=11 // pred_region
          %212 = vsyncadd [#allocation7], 0
          %s213 = smul.addr %s28, 8
          %s214 = scalar_lea.hbm %s3, %s213
          %s215 = sshll.u32 %s214, 4
          %s216 = int_to_ptr.hbm [resolvable:$true] %s215
          %s217 = sshll.u32 [#allocation8], 4
          %s218 = int_to_ptr.vmem [resolvable:$true] %s217
          %223 = dma.hbm_to_vmem [thread:$0]  %s216, 2048, %s218, [#allocation7], 128, 128, 8
        $region24: #{tpu_custom_call.1} parent=11 // pred_fallthru
          _
        // Predicated region
        $region25: #{tpu_custom_call.1} parent=11 // pred_check
          %p224 = pneg %p150
        $region26: #{tpu_custom_call.1} parent=11 // pred_check_branch
          %226 = sbr.rel (%p224) target = $region28
        $region27: #{tpu_custom_call.1} parent=11 // pred_region
          %p227 = scmp.lt.s32.totalorder %s28, 0
          %s228 = scalar_select %p227, %s28, 0
          %s229 = scalar_lea.vmem %s4, %s228
        $region28: #{tpu_custom_call.1} parent=11 // pred_fallthru
          _
      $region12: #{tpu_custom_call.1} parent=5 // pred_fallthru
        _
      %p230 = scmp.lt.s32.totalorder %s18, 2
      // Predicated region
      $region29: #{tpu_custom_call.1} parent=5 // pred_check
        %p231 = pneg %p230
      $region30: #{tpu_custom_call.1} parent=5 // pred_check_branch
        %233 = sbr.rel (%p231) target = $region32
      $region31: #{tpu_custom_call.1} parent=5 // pred_region
        // Predicated region
        $region33: #{tpu_custom_call.1} parent=31 // pred_check
          %p234 = pneg %p50
        $region34: #{tpu_custom_call.1} parent=31 // pred_check_branch
          %236 = sbr.rel (%p234) target = $region36
        $region35: #{tpu_custom_call.1} parent=31 // pred_region
          %s237 = sand.u32 %s40, 1
          %s238 = scalar_lea.sflag [#allocation4], %s237
          %s239 = sand.u32 %s40, 1
          %s240 = smul.addr %s239, 8
          %s241 = scalar_lea.vmem [#allocation3], %s240
          %243 = vsyncadd %s238, 0
          %s244 = smul.addr %s25, 8
          %s245 = scalar_lea.hbm %s0, %s244
          %s247 = sshll.u32 %s245, 4
          %s248 = int_to_ptr.hbm [resolvable:$true] %s247
          %s249 = sshll.u32 %s241, 4
          %s250 = int_to_ptr.vmem [resolvable:$true] %s249
          %252 = dma.hbm_to_vmem [thread:$0]  %s248, 128, %s250, %s238
        $region36: #{tpu_custom_call.1} parent=31 // pred_fallthru
          _
      $region32: #{tpu_custom_call.1} parent=5 // pred_fallthru
        _
      %p253 = scmp.le.s32.totalorder 1, %s18
      %p254 = scmp.lt.s32.totalorder %s18, 3
      %p255 = pnand %p253, %p254
      %p256 = pneg %p255
      // Predicated region
      $region37: #{tpu_custom_call.1} parent=5 // pred_check
        _
      $region38: #{tpu_custom_call.1} parent=5 // pred_check_branch
        %258 = sbr.rel (%p255) target = $region40
      $region39: #{tpu_custom_call.1} parent=5 // pred_region
        %s259 = ssub.s32 %s18, 1
        %s260 = sand.u32 %s43, 1
        %s261 = scalar_lea.sflag [#allocation4], %s260
        %s262 = sand.u32 %s43, 1
        %s263 = smul.addr %s262, 8
        %s264 = scalar_lea.vmem [#allocation3], %s263
        // Predicated region
        $region41: #{tpu_custom_call.1} parent=39 // pred_check
          %p265 = pneg %p56
        $region42: #{tpu_custom_call.1} parent=39 // pred_check_branch
          %267 = sbr.rel (%p265) target = $region44
        $region43: #{tpu_custom_call.1} parent=39 // pred_region
          %269 = dma.done %s261, 128
        $region44: #{tpu_custom_call.1} parent=39 // pred_fallthru
          _
        // Predicated region
        $region45: #{tpu_custom_call.1} parent=39 // pred_check
          %p270 = pneg %p77
        $region46: #{tpu_custom_call.1} parent=39 // pred_check_branch
          %272 = sbr.rel (%p270) target = $region48
        $region47: #{tpu_custom_call.1} parent=39 // pred_region
          %274 = dma.done [#allocation7], 16
        $region48: #{tpu_custom_call.1} parent=39 // pred_fallthru
          _
        // Predicated region
        $region49: #{tpu_custom_call.1} parent=39 // pred_check
          %p275 = pneg %p124
        $region50: #{tpu_custom_call.1} parent=39 // pred_check_branch
          %277 = sbr.rel (%p275) target = $region52
        $region51: #{tpu_custom_call.1} parent=39 // pred_region
          %279 = dma.done [#allocation7], 2048
        $region52: #{tpu_custom_call.1} parent=39 // pred_fallthru
          _
        %s280 = sand.u32 %s43, 1
        %s281 = scalar_lea.sflag [#allocation4], %s280
        %s282 = sand.u32 %s43, 1
        %s283 = smul.addr %s282, 8
        %s284 = scalar_lea.vmem [#allocation3], %s283
        %p285 = pneg %p56
        %p286 = pneg %p53
        %p287 = pneg %p77
        %p288 = pneg %p74
        %p289 = pneg %p98
        %p290 = pneg %p95
        %p291 = pneg %p124
        %p292 = pneg %p121
        %p293 = scmp.lt.s32.totalorder %s28, 0
        %s294 = scalar_select %p293, %s28, 0
        %s295 = scalar_lea.vmem %s4, %s294
        %p296 = pneg %p150
        %p297 = pneg %p147
        %p298 = pneg %p178
        %p299 = pneg %p175
        %s300 = sand.u32 %s165, 1
        %s301 = scalar_lea.sflag [#allocation5], %s300
        %s302 = sand.u32 %s165, 1
        %s303 = smul.addr %s302, 8
        %s304 = scalar_lea.vmem [#allocation9], %s303
        %p305 = scmp.lt.s32.totalorder %s28, 0
        %s306 = scalar_select %p305, %s28, 0
        %s307 = scalar_lea.vmem %s4, %s306
        %p308 = scmp.eq.s32.totalorder %s28, 0
        // Predicated region
        $region53: #{tpu_custom_call.1} parent=39 // pred_check
          %p309 = pneg %p308
        $region54: #{tpu_custom_call.1} parent=39 // pred_check_branch
          %311 = sbr.rel (%p309) target = $region56
        $region55: #{tpu_custom_call.1} parent=39 // pred_region
          %v312 = vld [vmem:[%s264] sm:$0xff]
          %313 = vadd.xlane.f32.xlu0 %v312
          %v314 = vpop.xlane.xlu0 %313
          %v315 = vmul.f32 %v314, 0.03125
          %v316 = vmul.f32 %v312, %v312
          %317 = vadd.xlane.f32.xlu0 %v316
          %v318 = vpop.xlane.xlu0 %317
          %v319 = vmul.f32 %v318, 0.03125
          %v320 = vmul.f32 %v315, %v315
          %v321 = vsub.f32 %v319, %v320
          %v322 = vmax.f32 %v321, 0.0
          %v323 = vadd.f32 %v322, 1e-05
          %v324 = vrsqrt.pop %v323
          %v325 = vmul.f32 %v324, %v323
          %v326 = vmul.f32 %v325, %v324
          %v327 = vmul.f32 0.5, %v326
          %v328 = vsub.f32 1.5, %v327
          %v329 = vmul.f32 %v324, %v328
          %vm330 = vweird.f32 %v323
          %vm331 = vweird.f32 %v324
          %vm332 = vmor %vm330, %vm331
          %v333 = vsel %vm332, %v324, %v329
          %v334 = vsub.f32 %v312, %v315
          %v335 = vmul.f32 %v334, %v333
          %v336 = vld [vmem:[#allocation6] sm:$0x1]
          %v338 = vperm.slane %v336, 0
          %v340 = vmul.f32 %v335, %v338
          %v341 = vld [vmem:[%s2] sm:$0x1]
          %v343 = vperm.slane %v341, 0
          %v345 = vadd.f32 %v340, %v343
          %346 = vst [vmem:[#allocation2] sm:$0xff] %v345
        $region56: #{tpu_custom_call.1} parent=39 // pred_fallthru
          _
        %v347 = vld [vmem:[#allocation2] sm:$0xff]
        %v348 = vld [vmem:[#allocation8] sm:$0xff]
        %v349 = vld [vmem:[#allocation8 + $0x8] sm:$0xff]
        %v350 = vld [vmem:[#allocation8 + $0x10] sm:$0xff]
        %v351 = vld [vmem:[#allocation8 + $0x18] sm:$0xff]
        %v352 = vld [vmem:[#allocation8 + $0x20] sm:$0xff]
        %v353 = vld [vmem:[#allocation8 + $0x28] sm:$0xff]
        %v354 = vld [vmem:[#allocation8 + $0x30] sm:$0xff]
        %v355 = vld [vmem:[#allocation8 + $0x38] sm:$0xff]
        %v356 = vld [vmem:[#allocation8 + $0x40] sm:$0xff]
        %v357 = vld [vmem:[#allocation8 + $0x48] sm:$0xff]
        %v358 = vld [vmem:[#allocation8 + $0x50] sm:$0xff]
        %v359 = vld [vmem:[#allocation8 + $0x58] sm:$0xff]
        %v360 = vld [vmem:[#allocation8 + $0x60] sm:$0xff]
        %v361 = vld [vmem:[#allocation8 + $0x68] sm:$0xff]
        %v362 = vld [vmem:[#allocation8 + $0x70] sm:$0xff]
        %v363 = vld [vmem:[#allocation8 + $0x78] sm:$0xff]
        %v364 = vld [vmem:[%s307] sm:$0x1]
        %v366 = vperm.slane %v364, 0
        %368 = vmatpush.msra.mxu0 %v363
        %369 = vmatpush.msra.mxu0 %v362
        %370 = vmatpush.msra.mxu0 %v361
        %371 = vmatpush.msra.mxu0 %v360
        %372 = vmatpush.msra.mxu0 %v359
        %373 = vmatpush.msra.mxu0 %v358
        %374 = vmatpush.msra.mxu0 %v357
        %375 = vmatpush.msra.mxu0 %v356
        %376 = vmatpush.msra.mxu0 %v355
        %377 = vmatpush.msra.mxu0 %v354
        %378 = vmatpush.msra.mxu0 %v353
        %379 = vmatpush.msra.mxu0 %v352
        %380 = vmatpush.msra.mxu0 %v351
        %381 = vmatpush.msra.mxu0 %v350
        %382 = vmatpush.msra.mxu0 %v349
        %383 = vmatpush.msra.mxu0 %v348
        %384 = vmatmul.f32.gmra.mxu0 %v347
        %v385 = vpop.f32.mrf.mxu0
        %v386 = vadd.f32 %v366, %v385
        %387 = vdwg.mxu0
        %388 = vst [vmem:[%s304] sm:$0xff] %v386
        %s389 = sand.u32 %s165, 1
        %s390 = scalar_lea.sflag [#allocation5], %s389
        %s391 = sand.u32 %s165, 1
        %s392 = smul.addr %s391, 8
        %s393 = scalar_lea.vmem [#allocation9], %s392
        // Predicated region
        $region57: #{tpu_custom_call.1} parent=39 // pred_check
          %p394 = pneg %p175
        $region58: #{tpu_custom_call.1} parent=39 // pred_check_branch
          %396 = sbr.rel (%p394) target = $region60
        $region59: #{tpu_custom_call.1} parent=39 // pred_region
          %398 = vsyncadd %s390, 0
          %s399 = sadd.s32 %s28, %s27
          %s400 = smul.addr %s399, 8
          %s401 = scalar_lea.hbm %s5, %s400
          %s403 = sshll.u32 %s393, 4
          %s404 = int_to_ptr.vmem [resolvable:$true] %s403
          %s405 = sshll.u32 %s401, 4
          %s406 = int_to_ptr.hbm [resolvable:$true] %s405
          %408 = dma.vmem_to_hbm [thread:$0]  %s404, 128, %s406, %s390
        $region60: #{tpu_custom_call.1} parent=39 // pred_fallthru
          _
      $region40: #{tpu_custom_call.1} parent=5 // pred_fallthru
        _
      %p409 = scmp.le.s32.totalorder 2, %s18
      // Predicated region
      $region61: #{tpu_custom_call.1} parent=5 // pred_check
        %p410 = pneg %p409
      $region62: #{tpu_custom_call.1} parent=5 // pred_check_branch
        %412 = sbr.rel (%p410) target = $region64
      $region63: #{tpu_custom_call.1} parent=5 // pred_region
        %s413 = ssub.s32 %s18, 2
        // Predicated region
        $region65: #{tpu_custom_call.1} parent=63 // pred_check
          %p414 = pneg %p181
        $region66: #{tpu_custom_call.1} parent=63 // pred_check_branch
          %416 = sbr.rel (%p414) target = $region68
        $region67: #{tpu_custom_call.1} parent=63 // pred_region
          %s417 = sand.u32 %s166, 1
          %s418 = scalar_lea.sflag [#allocation5], %s417
          %s419 = sand.u32 %s166, 1
          %s420 = smul.addr %s419, 8
          %s421 = scalar_lea.vmem [#allocation9], %s420
          %423 = dma.done %s418, 128
        $region68: #{tpu_custom_call.1} parent=63 // pred_fallthru
          _
      $region64: #{tpu_custom_call.1} parent=5 // pred_fallthru
        _
    $region6: #{tpu_custom_call.1} parent=1 // loop_footer
      %s22 = sadd.s32 1, %s18
    $region7: #{tpu_custom_call.1} parent=1 // loop_footer_branch
      %17 = sbr.rel target = $region3
    $region8: #{tpu_custom_call.1} parent=1 // loop_exit
      _
    %424 = vsyncpa [#allocation4], 1
    %s425 = scalar_lea.sflag [#allocation4], 1
    %426 = vsyncpa %s425, 1
    %427 = vsyncpa [#allocation7], 1
    %428 = vsyncpa [#allocation5], 1
    %s429 = scalar_lea.sflag [#allocation5], 1
    %430 = vsyncpa %s429, 1

</llo_original>
